<compile_context>
chip_gen: v7x
topology: tpu7x:2x2x1
jax: 0.10.0
libtpu: 0.0.40
codegen_flags: <defaults>
</compile_context>

<pallas_src>
import jax
import jax.numpy as jnp
from jax.experimental import pallas as pl
from jax.experimental.pallas import tpu as pltpu


def _hsigmoid_kernel(x_ref, o_ref):
    x = x_ref[...]
    # relu6(x + 3) / 6 == clamp(x + 3, 0, 6) / 6   (true divide, like torch)
    o_ref[...] = (jnp.clip(x + 3.0, 0.0, 6.0) / 6.0).astype(o_ref.dtype)


def _default_tile_bytes() -> int:
    """Per-generation nominal tile size (per buffer)."""
    try:
        kind = jax.devices()[0].device_kind.lower()
    except Exception:
        kind = ""
    # v6e / v7x: 32 MiB scoped-VMEM default -> 4 MiB tiles keep the 2-in +
    # 2-out double-buffered footprint at 16 MiB with headroom and halve the
    # grid-step count (per-step overhead matters at v7x's ~3.2 TB/s HBM).
    if ("v6" in kind) or ("v7" in kind) or ("tpu7" in kind):
        return 4 * 1024 * 1024
    # v5e (16 MiB scoped default) and anything unrecognized: 2 MiB tiles
    # (8 MiB footprint) already hide per-step overhead at <=1.4 TB/s HBM.
    return 2 * 1024 * 1024


def _hsigmoid_2d(x2d, block_shape, grid, index_map):
    n = x2d.size
    itemsize = jnp.dtype(x2d.dtype).itemsize
    return pl.pallas_call(
        _hsigmoid_kernel,
        out_shape=jax.ShapeDtypeStruct(x2d.shape, x2d.dtype),
        grid_spec=pltpu.PrefetchScalarGridSpec(
            num_scalar_prefetch=0,
            grid=grid,
            in_specs=[pl.BlockSpec(block_shape, index_map)],
            out_specs=pl.BlockSpec(block_shape, index_map),
        ),
        compiler_params=pltpu.CompilerParams(
            dimension_semantics=("parallel",),
        ),
        cost_estimate=pl.CostEstimate(
            flops=4 * n, transcendentals=0, bytes_accessed=2 * n * itemsize),
    )(x2d)


# Only force a multi-block grid when each forced block is at least this big
# (below that, per-step overhead dominates and a single block is better).
_SPLIT_GRANULE_BYTES = 512 * 1024


def hsigmoid(x: jax.Array, *, target_tile_bytes: int | None = None) -> jax.Array:
    """Elementwise hard-sigmoid matching torch F.relu6(x + 3) / 6."""
    orig_shape = x.shape
    n = x.size
    if n == 0:
        return x
    dtype = x.dtype
    itemsize = jnp.dtype(dtype).itemsize
    if target_tile_bytes is None:
        target_tile_bytes = _default_tile_bytes()

    # Sublane granularity by dtype packing (f32: 8, bf16/f16: 16, 8-bit: 32).
    sub = 8 * max(1, 4 // itemsize)
    total_bytes = n * itemsize
    flat = x.reshape(-1)

    # --- Lane-dense path: n is a multiple of 128 -------------------------------
    cands = (8192, 4096, 2048, 1024, 512, 256, 128)
    lanes = None
    # Prefer the widest lane count that also leaves full sublane groups.
    for cand in cands:
        if n % cand == 0 and (n // cand) % sub == 0:
            lanes = cand
            break
    if lanes is None:
        for cand in cands:
            if n % cand == 0:
                lanes = cand
                break

    if lanes is not None:
        rows = n // lanes
        x2d = flat.reshape(rows, lanes)
        row_bytes = lanes * itemsize
        max_block_rows = max(sub, (target_tile_bytes // row_bytes) // sub * sub)

        # Force >= 2 (ideally 4) blocks for mid-size tensors so the parallel
        # grid axis shards across TensorCores (v7x) and DMAs pipeline.
        if rows >= 4 * sub and total_bytes >= 4 * _SPLIT_GRANULE_BYTES:
            min_blocks = 4
        elif rows >= 2 * sub and total_bytes >= 2 * _SPLIT_GRANULE_BYTES:
            min_blocks = 2
        else:
            min_blocks = 1

        if min_blocks == 1 and rows <= max_block_rows:
            # Single full-array block: exempt from (8,128) divisibility,
            # no per-step grid overhead.
            block_shape = (rows, lanes)
            grid = (1,)
        else:
            cap = max(sub, (rows // min_blocks) // sub * sub)
            block_rows = max(sub, min(max_block_rows, cap))
            block_shape = (block_rows, lanes)
            grid = (pl.cdiv(rows, block_rows),)  # partial last block masked by Pallas

        out2d = _hsigmoid_2d(x2d, block_shape, grid, lambda i: (i, 0))
        return out2d.reshape(orig_shape)

    # --- Odd-size path: n not a multiple of 128 --------------------------------
    # View as (1, n) and tile along the lane axis; Pallas masks the partial
    # last block, so there is no pad and no output slice (no extra HBM passes).
    x2d = flat.reshape(1, n)
    # A (1, L) block uses ~1 of `sub` sublanes per (8,128) VMEM tile, so its
    # VMEM footprint is ~sub x its nominal bytes; keep the nominal size small
    # so 2-in + 2-out buffers stay within the scoped-VMEM default everywhere.
    nominal_bytes = max(1024 * itemsize, target_tile_bytes // sub)
    block_lanes = max(1024, (nominal_bytes // itemsize) // 1024 * 1024)

    if n <= block_lanes:
        block_shape = (1, n)     # single full-array block
        grid = (1,)
    else:
        block_shape = (1, block_lanes)
        grid = (pl.cdiv(n, block_lanes),)  # masked partial last block

    out2d = _hsigmoid_2d(x2d, block_shape, grid, lambda i: (0, i))
    return out2d.reshape(orig_shape)


def _hsigmoid_ref(x):
    return jnp.clip(x + 3.0, 0.0, 6.0) / 6.0


if __name__ == "__main__":
    key = jax.random.PRNGKey(0)
    k1, k2, k3, k4, k5 = jax.random.split(key, 5)

    # 1) Small NCHW conv-block activation shape (lane-dense, single block).
    x = jax.random.normal(k1, (2, 4, 16, 16), dtype=jnp.float32) * 4.0
    y = jax.block_until_ready(hsigmoid(x))
    assert y.shape == x.shape and y.dtype == x.dtype
    assert jnp.allclose(y, _hsigmoid_ref(x), atol=1e-6, rtol=1e-6), "mismatch (small)"

    # 2) Larger tensor: multi-block grid (megacore-shardable, pipelined DMAs).
    x2 = jax.random.normal(k2, (8, 8, 128, 128), dtype=jnp.float32) * 4.0
    y2 = jax.block_until_ready(hsigmoid(x2))
    assert jnp.allclose(y2, _hsigmoid_ref(x2), atol=1e-6, rtol=1e-6), "mismatch (tiled)"

    # 3) Odd size (not a multiple of 128), small: single (1, n) block, no pad.
    x3 = jax.random.normal(k3, (2, 3, 7, 5), dtype=jnp.float32) * 4.0
    y3 = jax.block_until_ready(hsigmoid(x3))
    assert y3.shape == x3.shape
    assert jnp.allclose(y3, _hsigmoid_ref(x3), atol=1e-6, rtol=1e-6), "mismatch (odd small)"

    # 4) Odd size, large: lane-tiled multi-block grid with a masked tail block.
    x4 = jax.random.normal(k4, (262921,), dtype=jnp.float32) * 4.0
    y4 = jax.block_until_ready(hsigmoid(x4))
    assert jnp.allclose(y4, _hsigmoid_ref(x4), atol=1e-6, rtol=1e-6), "mismatch (odd large)"

    # 5) bf16 input: math stays in bf16 (like torch bf16).
    x5 = jax.random.normal(k5, (2, 4, 16, 16), dtype=jnp.bfloat16) * 4.0
    y5 = jax.block_until_ready(hsigmoid(x5))
    assert y5.dtype == jnp.bfloat16 and y5.shape == x5.shape
    assert jnp.allclose(y5.astype(jnp.float32),
                        _hsigmoid_ref(x5.astype(jnp.float32)),
                        atol=2e-2, rtol=2e-2), "mismatch (bf16)"

    print("KERNEL_OK")
</pallas_src>

<mosaic_0001>
module attributes {stable_mosaic.version = 11 : i64} {
  func.func @_hsigmoid_kernel(%arg0: i32, %arg1: memref<8x256xf32, #tpu.memory_space<vmem>>, %arg2: memref<8x256xf32, #tpu.memory_space<vmem>>) attributes {dimension_semantics = [#tpu.dimension_semantics<parallel>], iteration_bounds = array<i64: 1>, scalar_prefetch = 0 : i64, scratch_operands = 0 : i64, tpu.core_type = #tpu.core_type<tc>, window_params = [{transform_indices = @transform_0, window_bounds = array<i64: 8, 256>}, {transform_indices = @transform_1, window_bounds = array<i64: 8, 256>}]} {
    %c0 = arith.constant 0 : index
    %c0_0 = arith.constant 0 : index
    %0 = vector.load %arg1[%c0, %c0_0] : memref<8x256xf32, #tpu.memory_space<vmem>>, vector<8x256xf32>
    %cst = arith.constant 3.000000e+00 : f32
    %1 = vector.broadcast %cst : f32 to vector<8x256xf32>
    %2 = arith.addf %0, %1 : vector<8x256xf32>
    %cst_1 = arith.constant 0.000000e+00 : f32
    %cst_2 = arith.constant 6.000000e+00 : f32
    %3 = vector.broadcast %cst_1 : f32 to vector<8x256xf32>
    %4 = arith.maximumf %3, %2 : vector<8x256xf32>
    %5 = vector.broadcast %cst_2 : f32 to vector<8x256xf32>
    %6 = arith.minimumf %5, %4 : vector<8x256xf32>
    %cst_3 = arith.constant 6.000000e+00 : f32
    %7 = vector.broadcast %cst_3 : f32 to vector<8x256xf32>
    %8 = arith.divf %6, %7 : vector<8x256xf32>
    %c0_4 = arith.constant 0 : index
    %c0_5 = arith.constant 0 : index
    %9 = vector.load %arg2[%c0_4, %c0_5] : memref<8x256xf32, #tpu.memory_space<vmem>>, vector<8x256xf32>
    tpu.vector_store %arg2[%c0_4, %c0_5], %8 {strides = array<i32>} : memref<8x256xf32, #tpu.memory_space<vmem>>, vector<8x256xf32>,
    return
  }
  func.func @transform_0(%arg0: i32) -> (i32, i32) {
    %c0_i32 = arith.constant 0 : i32
    %c0_i32_0 = arith.constant 0 : i32
    return %arg0, %c0_i32 : i32, i32
  }
  func.func @transform_1(%arg0: i32) -> (i32, i32) {
    %c0_i32 = arith.constant 0 : i32
    %c0_i32_0 = arith.constant 0 : i32
    return %arg0, %c0_i32 : i32, i32
  }
}

</mosaic_0001>

<llo_original>
// kernel: tpu_custom_call.1
$region0: #{tpu_custom_call.1}
  #allocation0 [shape = 'u32[]', space=smem, size = 0x4, offset = 0x4, fixed_abs, tag = 'smem constant byte address 0x4 - core index']
  #allocation1 [shape = 'u32[144,128]{1,0:T(1,128)}', space=vmem, size = 0x12000, scoped, tag = 'internal scratch']
  %s0 = inlined_call_operand.hbm [shape: f32[8,256], index: 0, kind: input, shape index: {}]
  %s1 = inlined_call_operand.hbm [shape: f32[8,256], index: 1, kind: output, shape index: {}]
  %s2 = sld [smem:[#allocation0]]
  $region18: #{tpu_custom_call.1} parent=0
    _
  %s4 = ssub.s32 1, %s2
  %s5 = scalar_select 0, %s4, %s2
  $region1: #{tpu_custom_call.1} parent=0
    #allocation2 [shape = 'u8[8192]{0}', space=vmem, size = 0x2000, scoped, tag = 'input window, operand 0, single buffered']
    #allocation3 [shape = 's32[1]{0}', space=sflag, size = 0x4, scoped, tag = 'scoped memory for tpu_custom_call.1']
    #allocation4 [shape = 's32[1]{0}', space=sflag, size = 0x4, scoped, tag = 'scoped memory for tpu_custom_call.1']
    #allocation5 [shape = 'u8[8192]{0}', space=vmem, size = 0x2000, scoped, tag = 'output window, operand 0, single buffered']
    %6 = vsyncpa [#allocation3], 0
    %7 = vsyncpa [#allocation4], 0
    // Predicated region
    $region2: #{tpu_custom_call.1} parent=1 // pred_check
      _
    $region3: #{tpu_custom_call.1} parent=1 // pred_check_branch
      %9 = sbr.rel (0) target = $region5
    $region4: #{tpu_custom_call.1} parent=1 // pred_region
      %s11 = ssub.s32 256, 256
      %12 = vsyncadd [#allocation3], %s11
      %s14 = sshll.u32 [#allocation2], 4
      %s15 = int_to_ptr.vmem [resolvable:$true] %s14
      %17 = dma.hbm_to_vmem [thread:$0]  %s0, 256, %s15, [#allocation3]
    $region5: #{tpu_custom_call.1} parent=1 // pred_fallthru
      _
    // Predicated region
    $region6: #{tpu_custom_call.1} parent=1 // pred_check
      _
    $region7: #{tpu_custom_call.1} parent=1 // pred_check_branch
      %19 = sbr.rel (0) target = $region9
    $region8: #{tpu_custom_call.1} parent=1 // pred_region
      %20 = dma.done [#allocation3], 256
    $region9: #{tpu_custom_call.1} parent=1 // pred_fallthru
      _
    %v21 = vld [vmem:[#allocation2] sm:$0xff]
    %v22 = vld [vmem:[#allocation2 + $0x8] sm:$0xff]
    %v23 = vadd.f32 %v21, 3.0
    %v24 = vadd.f32 %v22, 3.0
    %v25 = vmax.f32 %v23, 0.0
    %v26 = vmax.f32 %v24, 0.0
    %v27 = vmin.f32 %v25, 6.0
    %v28 = vmin.f32 %v26, 6.0
    %v29 = vrcp.pop 6.0
    %v30 = vmul.f32 %v27, %v29
    %v31 = vmul.f32 %v28, %v29
    %32 = vst [vmem:[#allocation5] sm:$0xff] %v30
    %33 = vst [vmem:[#allocation5 + $0x8] sm:$0xff] %v31
    // Predicated region
    $region10: #{tpu_custom_call.1} parent=1 // pred_check
      _
    $region11: #{tpu_custom_call.1} parent=1 // pred_check_branch
      %35 = sbr.rel (0) target = $region13
    $region12: #{tpu_custom_call.1} parent=1 // pred_region
      %s37 = ssub.s32 256, 256
      %38 = vsyncadd [#allocation4], %s37
      %s40 = sshll.u32 [#allocation5], 4
      %s41 = int_to_ptr.vmem [resolvable:$true] %s40
      %43 = dma.vmem_to_hbm [thread:$0]  %s41, 256, %s1, [#allocation4]
    $region13: #{tpu_custom_call.1} parent=1 // pred_fallthru
      _
    // Predicated region
    $region14: #{tpu_custom_call.1} parent=1 // pred_check
      _
    $region15: #{tpu_custom_call.1} parent=1 // pred_check_branch
      %45 = sbr.rel (0) target = $region17
    $region16: #{tpu_custom_call.1} parent=1 // pred_region
      %46 = dma.done [#allocation4], 256
    $region17: #{tpu_custom_call.1} parent=1 // pred_fallthru
      _
    %47 = vsyncpa [#allocation3], 1
    %48 = vsyncpa [#allocation4], 1

</llo_original>
